<compile_context>
chip_gen: v5e
topology: v5e:2x2
jax: 0.10.0
libtpu: 0.0.40
codegen_flags: <defaults>
</compile_context>

<pallas_src>
import jax
import jax.numpy as jnp
from jax.experimental import pallas as pl
from jax.experimental.pallas import tpu as pltpu

K0 = 128
N0 = 64

_TM_MAX_F32 = 4096   # ~6 MiB double-buffered VMEM budget
_TM_MAX_BF16 = 8192  # bf16 x halves bytes -> double the tile


def _round_up(x, m):
    return ((x + m - 1) // m) * m


def _linear_kernel(x_ref, wt_ref, o_ref):
    # x_ref : (TM, K0) row tile in VMEM (f32 or bf16)
    # wt_ref: (K0, N0) pre-transposed weight, constant across the grid
    # o_ref : (TM, N0) f32 output tile
    # Row-major contraction on the MXU, f32 accumulation; o_ref is f32 so no
    # extra cast on the store path.
    o_ref[...] = jnp.dot(
        x_ref[...], wt_ref[...], preferred_element_type=jnp.float32
    )


def _choose_tm(M, tm_max):
    """Row-tile size: big tiles to amortize grid-step overhead, and >=2
    balanced tiles for mid-size M so both v7x TensorCores get work."""
    if M <= 512:
        # Tiny problem: single well-formed block (block dim == full dim).
        return M
    num_tiles = max(2, pl.cdiv(M, tm_max))
    return min(tm_max, _round_up(pl.cdiv(M, num_tiles), 8))


def linear_no_bias(x, weight, *, cast_to_bf16=False):
    """x: [M, K0] float32, weight: [N0, K0] float32 (PyTorch layout).

    Returns x @ weight.T of shape [M, N0] (float32).

    cast_to_bf16=True casts x / weight to bf16 in the wrapper (f32 MXU
    accumulation is kept); this halves the dominant HBM stream but loosens
    accuracy to ~1e-2 relative.
    """
    M, K = x.shape
    N, Kw = weight.shape
    assert K == Kw == K0 and N == N0

    # One-time 32 KiB transpose outside the kernel: kernel contracts (1, 0),
    # so the stationary operand never needs a per-step XLU transpose.
    w_t = weight.T  # [K0, N0]

    if cast_to_bf16:
        x = x.astype(jnp.bfloat16)
        w_t = w_t.astype(jnp.bfloat16)
        tm_max = _TM_MAX_BF16
    else:
        tm_max = _TM_MAX_F32

    TM = _choose_tm(M, tm_max)
    grid = (pl.cdiv(M, TM),)

    in_bytes = jnp.dtype(x.dtype).itemsize
    cost = pl.CostEstimate(
        flops=2 * M * K * N,
        transcendentals=0,
        bytes_accessed=(M * K + K * N) * in_bytes + M * N * 4,
    )

    return pl.pallas_call(
        _linear_kernel,
        out_shape=jax.ShapeDtypeStruct((M, N), jnp.float32),
        grid_spec=pl.GridSpec(
            grid=grid,
            in_specs=[
                # x: tiled over rows, streamed / double-buffered.
                pl.BlockSpec((TM, K), lambda i: (i, 0)),
                # weight: whole array, same block every step -> VMEM-resident.
                pl.BlockSpec((K, N), lambda i: (0, 0)),
            ],
            out_specs=pl.BlockSpec((TM, N), lambda i: (i, 0)),
        ),
        compiler_params=pltpu.CompilerParams(
            # Row tiles are independent -> shard across TensorCores on v7x
            # (no-op on single-TC v5e/v6e).
            dimension_semantics=("parallel",),
            # Headroom for the large double-buffered tiles; safe on all
            # generations (v5e scoped default is only 16 MiB).
            vmem_limit_bytes=32 * 1024 * 1024,
        ),
        cost_estimate=cost,
    )(x, w_t)


if __name__ == "__main__":
    key = jax.random.PRNGKey(0)
    kx, kw = jax.random.split(key)

    # Small batch of "attention weights" rows: [M, K0]
    M = 8
    x = jax.random.normal(kx, (M, K0), dtype=jnp.float32)

    # Deterministic weight init mimicking nn.Linear default:
    # uniform(-1/sqrt(K0), 1/sqrt(K0)), shape [N0, K0]
    bound = 1.0 / jnp.sqrt(jnp.float32(K0))
    weight = jax.random.uniform(
        kw, (N0, K0), dtype=jnp.float32, minval=-bound, maxval=bound
    )

    ref = x @ weight.T

    # Exact-semantics f32 path (matches the PyTorch module).
    out = jax.block_until_ready(linear_no_bias(x, weight))
    assert out.shape == (M, N0)
    assert jnp.allclose(out, ref, atol=1e-5, rtol=1e-5)

    # bf16 fast path (halved x DMA bytes, f32 accumulation) -- looser tolerance.
    out_bf16 = jax.block_until_ready(linear_no_bias(x, weight, cast_to_bf16=True))
    assert out_bf16.shape == (M, N0)
    assert jnp.allclose(out_bf16, ref, atol=2e-2, rtol=2e-2)

    print("KERNEL_OK")
</pallas_src>

<mosaic_0001>
module attributes {stable_mosaic.version = 11 : i64} {
  func.func @_linear_kernel(%arg0: i32, %arg1: memref<8x128xf32, #tpu.memory_space<vmem>>, %arg2: memref<128x64xf32, #tpu.memory_space<vmem>>, %arg3: memref<8x64xf32, #tpu.memory_space<vmem>>) attributes {dimension_semantics = [#tpu.dimension_semantics<parallel>], iteration_bounds = array<i64: 1>, scalar_prefetch = 0 : i64, scratch_operands = 0 : i64, tpu.core_type = #tpu.core_type<tc>, window_params = [{transform_indices = @transform_0, window_bounds = array<i64: 8, 128>}, {pipeline_mode = #tpu.pipeline_mode<synchronous>, transform_indices = @transform_1, window_bounds = array<i64: 128, 64>}, {transform_indices = @transform_2, window_bounds = array<i64: 8, 64>}]} {
    %c0 = arith.constant 0 : index
    %c0_0 = arith.constant 0 : index
    %0 = vector.load %arg1[%c0, %c0_0] : memref<8x128xf32, #tpu.memory_space<vmem>>, vector<8x128xf32>
    %c0_1 = arith.constant 0 : index
    %c0_2 = arith.constant 0 : index
    %1 = vector.load %arg2[%c0_1, %c0_2] : memref<128x64xf32, #tpu.memory_space<vmem>>, vector<128x64xf32>
    %cst = arith.constant dense<0.000000e+00> : vector<8x64xf32>
    %2 = tpu.matmul %0, %1, %cst {dimension_numbers = #tpu.dot_dimension_numbers<[1], [0], [0], [1], [0, 0, 1, 1], [], []>} : vector<8x128xf32>, vector<128x64xf32>, vector<8x64xf32> -> vector<8x64xf32>
    %c0_3 = arith.constant 0 : index
    %c0_4 = arith.constant 0 : index
    %3 = vector.load %arg3[%c0_3, %c0_4] : memref<8x64xf32, #tpu.memory_space<vmem>>, vector<8x64xf32>
    tpu.vector_store %arg3[%c0_3, %c0_4], %2 {strides = array<i32>} : memref<8x64xf32, #tpu.memory_space<vmem>>, vector<8x64xf32>,
    return
  }
  func.func @transform_0(%arg0: i32) -> (i32, i32) {
    %c0_i32 = arith.constant 0 : i32
    %c0_i32_0 = arith.constant 0 : i32
    return %arg0, %c0_i32 : i32, i32
  }
  func.func @transform_1(%arg0: i32) -> (i32, i32) {
    %c0_i32 = arith.constant 0 : i32
    %c0_i32_0 = arith.constant 0 : i32
    %c0_i32_1 = arith.constant 0 : i32
    return %c0_i32, %c0_i32_0 : i32, i32
  }
  func.func @transform_2(%arg0: i32) -> (i32, i32) {
    %c0_i32 = arith.constant 0 : i32
    %c0_i32_0 = arith.constant 0 : i32
    return %arg0, %c0_i32 : i32, i32
  }
}

</mosaic_0001>

<llo_original>
// kernel: tpu_custom_call.1
$region0: #{tpu_custom_call.1}
  #allocation0 [shape = 'u32[]', space=smem, size = 0x4, offset = 0x4, fixed_abs, tag = 'smem constant byte address 0x4 - core index']
  #allocation1 [shape = 'u32[72,128]{1,0:T(1,128)}', space=vmem, size = 0x9000, scoped, tag = 'internal scratch']
  %s0 = inlined_call_operand.vmem [shape: f32[8,128], index: 0, kind: input, shape index: {}]
  %s1 = inlined_call_operand.vmem [shape: f32[128,64], index: 1, kind: input, shape index: {}]
  %s2 = inlined_call_operand.hbm [shape: f32[8,64], index: 2, kind: output, shape index: {}]
  %s3 = sld [smem:[#allocation0]]
  $region18: #{tpu_custom_call.1} parent=0
    _
  %s5 = ssub.s32 1, %s3
  %s6 = scalar_select 0, %s5, %s3
  $region1: #{tpu_custom_call.1} parent=0
    #allocation2 [shape = 'u8[4096]{0}', space=vmem, size = 0x1000, scoped, tag = 'output window, operand 0, single buffered']
    #allocation3 [shape = 's32[1]{0}', space=sflag, size = 0x4, scoped, tag = 'scoped memory for tpu_custom_call.1']
    %7 = vsyncpa [#allocation3], 0
    // Predicated region
    $region2: #{tpu_custom_call.1} parent=1 // pred_check
      _
    $region3: #{tpu_custom_call.1} parent=1 // pred_check_branch
      %9 = sbr.rel (0) target = $region5
    $region4: #{tpu_custom_call.1} parent=1 // pred_region
      _
    $region5: #{tpu_custom_call.1} parent=1 // pred_fallthru
      _
    // Predicated region
    $region6: #{tpu_custom_call.1} parent=1 // pred_check
      _
    $region7: #{tpu_custom_call.1} parent=1 // pred_check_branch
      %11 = sbr.rel (0) target = $region9
    $region8: #{tpu_custom_call.1} parent=1 // pred_region
      _
    $region9: #{tpu_custom_call.1} parent=1 // pred_fallthru
      _
    %v12 = vld [vmem:[%s0] sm:$0xff]
    %v13 = vld [vmem:[%s1] sm:$0xff]
    %v14 = vld [vmem:[%s1 + $0x8] sm:$0xff]
    %v15 = vld [vmem:[%s1 + $0x10] sm:$0xff]
    %v16 = vld [vmem:[%s1 + $0x18] sm:$0xff]
    %v17 = vld [vmem:[%s1 + $0x20] sm:$0xff]
    %v18 = vld [vmem:[%s1 + $0x28] sm:$0xff]
    %v19 = vld [vmem:[%s1 + $0x30] sm:$0xff]
    %v20 = vld [vmem:[%s1 + $0x38] sm:$0xff]
    %v21 = vld [vmem:[%s1 + $0x40] sm:$0xff]
    %v22 = vld [vmem:[%s1 + $0x48] sm:$0xff]
    %v23 = vld [vmem:[%s1 + $0x50] sm:$0xff]
    %v24 = vld [vmem:[%s1 + $0x58] sm:$0xff]
    %v25 = vld [vmem:[%s1 + $0x60] sm:$0xff]
    %v26 = vld [vmem:[%s1 + $0x68] sm:$0xff]
    %v27 = vld [vmem:[%s1 + $0x70] sm:$0xff]
    %v28 = vld [vmem:[%s1 + $0x78] sm:$0xff]
    %29 = vmatpush.msra.mxu0 %v28
    %30 = vmatpush.msra.mxu0 %v27
    %31 = vmatpush.msra.mxu0 %v26
    %32 = vmatpush.msra.mxu0 %v25
    %33 = vmatpush.msra.mxu0 %v24
    %34 = vmatpush.msra.mxu0 %v23
    %35 = vmatpush.msra.mxu0 %v22
    %36 = vmatpush.msra.mxu0 %v21
    %37 = vmatpush.msra.mxu0 %v20
    %38 = vmatpush.msra.mxu0 %v19
    %39 = vmatpush.msra.mxu0 %v18
    %40 = vmatpush.msra.mxu0 %v17
    %41 = vmatpush.msra.mxu0 %v16
    %42 = vmatpush.msra.mxu0 %v15
    %43 = vmatpush.msra.mxu0 %v14
    %44 = vmatpush.msra.mxu0 %v13
    %45 = vmatmul.f32.gmra.mxu0 %v12
    %v46 = vpop.f32.mrf.mxu0
    %v47 = vadd.f32 0.0, %v46
    %48 = vdwg.mxu0
    %vm49 = vcmask 523264
    %50 = vst.msk [vmem:[#allocation2] sm:$0xff] %vm49, %v47
    // Predicated region
    $region10: #{tpu_custom_call.1} parent=1 // pred_check
      _
    $region11: #{tpu_custom_call.1} parent=1 // pred_check_branch
      %52 = sbr.rel (0) target = $region13
    $region12: #{tpu_custom_call.1} parent=1 // pred_region
      %54 = vsyncadd [#allocation3], 0
      %s56 = sshll.u32 [#allocation2], 4
      %s57 = int_to_ptr.vmem [resolvable:$true] %s56
      %s58 = sshll.u32 %s2, 4
      %s59 = int_to_ptr.hbm [resolvable:$true] %s58
      %61 = dma.vmem_to_hbm [thread:$0]  %s57, 128, %s59, [#allocation3]
    $region13: #{tpu_custom_call.1} parent=1 // pred_fallthru
      _
    // Predicated region
    $region14: #{tpu_custom_call.1} parent=1 // pred_check
      _
    $region15: #{tpu_custom_call.1} parent=1 // pred_check_branch
      %63 = sbr.rel (0) target = $region17
    $region16: #{tpu_custom_call.1} parent=1 // pred_region
      %65 = dma.done [#allocation3], 128
    $region17: #{tpu_custom_call.1} parent=1 // pred_fallthru
      _
    %66 = vsyncpa [#allocation3], 1

</llo_original>
